<compile_context>
chip_gen: v5e
topology: v5e:2x2
jax: 0.10.0
libtpu: 0.0.40
codegen_flags: <defaults>
</compile_context>

<pallas_src>
import functools

import jax
import jax.numpy as jnp
from jax.experimental import pallas as pl
from jax.experimental.pallas import tpu as pltpu

# Scoped-VMEM ceiling sized so the same config fits v7x (64 MiB physical per TC)
# as well as v5e/v6e (128 MiB).
_VMEM_LIMIT_BYTES = 48 * 1024 * 1024
_VMEM_BUDGET_BYTES = 40 * 1024 * 1024   # planning budget (headroom for Mosaic scratch)


# --------------------------------------------------------------------------- #
# Kernels
# --------------------------------------------------------------------------- #
def _layer1_single_kernel(a_ref, x_ref, w1_ref, b1_ref, w2_ref, p_ref):
    """P[i] = relu((Â[i,:] @ X) @ W1 + b1) @ W2   — single pass (tk == n_p)."""
    agg = jnp.dot(a_ref[...], x_ref[...], preferred_element_type=jnp.float32)
    h = jnp.dot(agg, w1_ref[...], preferred_element_type=jnp.float32) + b1_ref[...]
    h = jnp.maximum(h, 0.0)
    p = jnp.dot(h, w2_ref[...], preferred_element_type=jnp.float32)
    p_ref[...] = p.astype(p_ref.dtype)


def _layer1_reduce_kernel(a_ref, x_ref, w1_ref, b1_ref, w2_ref, p_ref, acc_ref,
                          *, tk, resident_x):
    """Same computation with the neighbour (N) axis tiled as a k-reduction."""
    k = pl.program_id(1)

    @pl.when(k == 0)
    def _():
        acc_ref[...] = jnp.zeros_like(acc_ref)

    if resident_x:
        x_blk = x_ref[pl.ds(pl.multiple_of(k * tk, tk), tk), :]
    else:
        x_blk = x_ref[...]
    acc_ref[...] += jnp.dot(a_ref[...], x_blk, preferred_element_type=jnp.float32)

    @pl.when(k == pl.num_programs(1) - 1)
    def _():
        h = jnp.dot(acc_ref[...], w1_ref[...], preferred_element_type=jnp.float32)
        h = jnp.maximum(h + b1_ref[...], 0.0)
        p = jnp.dot(h, w2_ref[...], preferred_element_type=jnp.float32)
        p_ref[...] = p.astype(p_ref.dtype)


def _layer2_single_kernel(a_ref, p_ref, b2_ref, o_ref):
    """O[i] = Â[i,:] @ P + b2   — single pass (tk == n_p)."""
    o = jnp.dot(a_ref[...], p_ref[...], preferred_element_type=jnp.float32)
    o_ref[...] = (o + b2_ref[...]).astype(o_ref.dtype)


def _layer2_reduce_kernel(a_ref, p_ref, b2_ref, o_ref, acc_ref, *, tk, resident_p):
    k = pl.program_id(1)

    @pl.when(k == 0)
    def _():
        acc_ref[...] = jnp.zeros_like(acc_ref)

    if resident_p:
        p_blk = p_ref[pl.ds(pl.multiple_of(k * tk, tk), tk), :]
    else:
        p_blk = p_ref[...]
    acc_ref[...] += jnp.dot(a_ref[...], p_blk, preferred_element_type=jnp.float32)

    @pl.when(k == pl.num_programs(1) - 1)
    def _():
        o_ref[...] = (acc_ref[...] + b2_ref[...]).astype(o_ref.dtype)


# --------------------------------------------------------------------------- #
# Helpers
# --------------------------------------------------------------------------- #
def _round_up(x, m):
    return ((x + m - 1) // m) * m


def _pick_tile(n_p, desired, minimum=128):
    """Largest tile <= desired that divides n_p (n_p is a multiple of 128)."""
    t = max(minimum, min(desired, n_p))
    while t > minimum and n_p % t:
        t //= 2
    if n_p % t:
        t = minimum
    return t


def _compiler_params(ndims):
    sem = ("parallel",) if ndims == 1 else ("parallel", "arbitrary")
    return pltpu.CompilerParams(dimension_semantics=sem,
                                vmem_limit_bytes=_VMEM_LIMIT_BYTES)


# --------------------------------------------------------------------------- #
# Layer 1 (fused with layer-2 projection):  P = relu((Â @ X) @ W1 + b1) @ W2
# --------------------------------------------------------------------------- #
def _fused_layer1(a, x, w1, b1, w2, *, tm, tk_desired, out_dtype, operand_resident=None):
    n_p = a.shape[0]
    in_p, hid_p = w1.shape
    out_p = w2.shape[1]
    a_by = jnp.dtype(a.dtype).itemsize
    x_by = jnp.dtype(x.dtype).itemsize
    o_by = jnp.dtype(out_dtype).itemsize
    w_bytes = (in_p * hid_p + hid_p * out_p + hid_p + out_p) * 4
    flops = 2 * n_p * n_p * in_p + 2 * n_p * in_p * hid_p + 2 * n_p * hid_p * out_p

    tk = _pick_tile(n_p, tk_desired)
    single_bytes = (2 * tm * n_p * a_by            # Â row band (double buffered)
                    + 2 * n_p * in_p * x_by        # resident X
                    + 2 * w_bytes                  # weights / biases
                    + 2 * tm * out_p * o_by        # output tile
                    + tm * (in_p + hid_p + out_p) * 4)  # in-kernel f32 temporaries

    if tk == n_p and single_bytes <= _VMEM_BUDGET_BYTES:
        # Small/medium graphs: no k axis, no accumulator scratch.
        cost = pl.CostEstimate(
            flops=flops, transcendentals=0,
            bytes_accessed=(n_p * n_p * a_by + n_p * in_p * x_by + w_bytes
                            + n_p * out_p * o_by))
        return pl.pallas_call(
            _layer1_single_kernel,
            out_shape=jax.ShapeDtypeStruct((n_p, out_p), out_dtype),
            grid_spec=pltpu.PrefetchScalarGridSpec(
                num_scalar_prefetch=0,
                grid=(n_p // tm,),
                in_specs=[pl.BlockSpec((tm, n_p), lambda i: (i, 0)),
                          pl.BlockSpec((n_p, in_p), lambda i: (0, 0)),
                          pl.BlockSpec((in_p, hid_p), lambda i: (0, 0)),
                          pl.BlockSpec((1, hid_p), lambda i: (0, 0)),
                          pl.BlockSpec((hid_p, out_p), lambda i: (0, 0))],
                out_specs=pl.BlockSpec((tm, out_p), lambda i: (i, 0)),
            ),
            compiler_params=_compiler_params(1),
            cost_estimate=cost,
        )(a, x, w1, b1, w2)

    # Large graphs: k-reduction grid (reduction axis last) + f32 accumulator.
    if tk == n_p:
        tk = _pick_tile(n_p, min(tk_desired, 1024))
    base_bytes = (2 * tm * tk * a_by + 2 * w_bytes + 2 * tm * out_p * o_by
                  + tm * (in_p + hid_p + out_p) * 4)
    if operand_resident is None:
        resident_x = (base_bytes + 2 * n_p * in_p * x_by) <= _VMEM_BUDGET_BYTES
    else:
        resident_x = bool(operand_resident)

    if resident_x:
        x_spec = pl.BlockSpec((n_p, in_p), lambda i, k: (0, 0))     # DMA'd once
        x_bytes_accessed = n_p * in_p * x_by
    else:
        x_spec = pl.BlockSpec((tk, in_p), lambda i, k: (k, 0))      # re-streamed
        x_bytes_accessed = (n_p // tm) * n_p * in_p * x_by

    cost = pl.CostEstimate(
        flops=flops, transcendentals=0,
        bytes_accessed=(n_p * n_p * a_by + x_bytes_accessed + w_bytes
                        + n_p * out_p * o_by))
    kernel = functools.partial(_layer1_reduce_kernel, tk=tk, resident_x=resident_x)
    return pl.pallas_call(
        kernel,
        out_shape=jax.ShapeDtypeStruct((n_p, out_p), out_dtype),
        grid_spec=pltpu.PrefetchScalarGridSpec(
            num_scalar_prefetch=0,
            grid=(n_p // tm, n_p // tk),
            in_specs=[pl.BlockSpec((tm, tk), lambda i, k: (i, k)),
                      x_spec,
                      pl.BlockSpec((in_p, hid_p), lambda i, k: (0, 0)),
                      pl.BlockSpec((1, hid_p), lambda i, k: (0, 0)),
                      pl.BlockSpec((hid_p, out_p), lambda i, k: (0, 0))],
            out_specs=pl.BlockSpec((tm, out_p), lambda i, k: (i, 0)),
            scratch_shapes=[pltpu.VMEM((tm, in_p), jnp.float32)],
        ),
        compiler_params=_compiler_params(2),
        cost_estimate=cost,
    )(a, x, w1, b1, w2)


# --------------------------------------------------------------------------- #
# Layer 2 aggregation:  H2 = Â @ P + b2
# --------------------------------------------------------------------------- #
def _layer2_agg(a, p, b2, *, tm, tk_desired, out_dtype, operand_resident=None):
    n_p = a.shape[0]
    out_p = p.shape[1]
    a_by = jnp.dtype(a.dtype).itemsize
    p_by = jnp.dtype(p.dtype).itemsize
    o_by = jnp.dtype(out_dtype).itemsize
    flops = 2 * n_p * n_p * out_p

    tk = _pick_tile(n_p, tk_desired)
    single_bytes = (2 * tm * n_p * a_by + 2 * n_p * out_p * p_by
                    + 2 * out_p * 4 + 2 * tm * out_p * o_by + tm * out_p * 4)

    if tk == n_p and single_bytes <= _VMEM_BUDGET_BYTES:
        cost = pl.CostEstimate(
            flops=flops, transcendentals=0,
            bytes_accessed=(n_p * n_p * a_by + n_p * out_p * p_by + out_p * 4
                            + n_p * out_p * o_by))
        return pl.pallas_call(
            _layer2_single_kernel,
            out_shape=jax.ShapeDtypeStruct((n_p, out_p), out_dtype),
            grid_spec=pltpu.PrefetchScalarGridSpec(
                num_scalar_prefetch=0,
                grid=(n_p // tm,),
                in_specs=[pl.BlockSpec((tm, n_p), lambda i: (i, 0)),
                          pl.BlockSpec((n_p, out_p), lambda i: (0, 0)),
                          pl.BlockSpec((1, out_p), lambda i: (0, 0))],
                out_specs=pl.BlockSpec((tm, out_p), lambda i: (i, 0)),
            ),
            compiler_params=_compiler_params(1),
            cost_estimate=cost,
        )(a, p, b2)

    if tk == n_p:
        tk = _pick_tile(n_p, min(tk_desired, 1024))
    base_bytes = (2 * tm * tk * a_by + 2 * tm * out_p * o_by + tm * out_p * 4
                  + 2 * out_p * 4)
    if operand_resident is None:
        resident_p = (base_bytes + 2 * n_p * out_p * p_by) <= _VMEM_BUDGET_BYTES
    else:
        resident_p = bool(operand_resident)

    if resident_p:
        p_spec = pl.BlockSpec((n_p, out_p), lambda i, k: (0, 0))    # DMA'd once
        p_bytes_accessed = n_p * out_p * p_by
    else:
        p_spec = pl.BlockSpec((tk, out_p), lambda i, k: (k, 0))     # re-streamed
        p_bytes_accessed = (n_p // tm) * n_p * out_p * p_by

    cost = pl.CostEstimate(
        flops=flops, transcendentals=0,
        bytes_accessed=(n_p * n_p * a_by + p_bytes_accessed + out_p * 4
                        + n_p * out_p * o_by))
    kernel = functools.partial(_layer2_reduce_kernel, tk=tk, resident_p=resident_p)
    return pl.pallas_call(
        kernel,
        out_shape=jax.ShapeDtypeStruct((n_p, out_p), out_dtype),
        grid_spec=pltpu.PrefetchScalarGridSpec(
            num_scalar_prefetch=0,
            grid=(n_p // tm, n_p // tk),
            in_specs=[pl.BlockSpec((tm, tk), lambda i, k: (i, k)),
                      p_spec,
                      pl.BlockSpec((1, out_p), lambda i, k: (0, 0))],
            out_specs=pl.BlockSpec((tm, out_p), lambda i, k: (i, 0)),
            scratch_shapes=[pltpu.VMEM((tm, out_p), jnp.float32)],
        ),
        compiler_params=_compiler_params(2),
        cost_estimate=cost,
    )(a, p, b2)


# --------------------------------------------------------------------------- #
# Full forward
# --------------------------------------------------------------------------- #
def normalize_adjacency(adj):
    """Â = D_dst^{-1/2} Aᵀ D_src^{-1/2}  (DGL GraphConv norm='both', deg clamped >= 1)."""
    deg_out = jnp.clip(jnp.sum(adj, axis=1), 1.0, None)   # src out-degree
    deg_in = jnp.clip(jnp.sum(adj, axis=0), 1.0, None)    # dst in-degree
    return jax.lax.rsqrt(deg_in)[:, None] * adj.T * jax.lax.rsqrt(deg_out)[None, :]


def gcn_forward(adj, x, w1, b1, w2, b2, *, compute_dtype=jnp.bfloat16,
                tm_desired=1024, tk_desired=1024, operand_resident=None):
    """H2 = Â @ (dropout(relu(Â @ X @ W1 + b1)) @ W2) + b2   (dropout = eval identity)."""
    n, in_size = x.shape
    hid_size = w1.shape[1]
    out_size = w2.shape[1]

    # Minimal padding: node dim and feature dims to 128 lanes.
    n_p = _round_up(n, 128)
    in_p = _round_up(in_size, 128)
    hid_p = _round_up(hid_size, 128)
    out_p = _round_up(out_size, 128)

    # Row tile: big, but always >= 2 row tiles when the graph allows it so the
    # "parallel" axis can shard across v7x's two TensorCores.
    tm_cap = max(128, n_p // 2) if n_p >= 256 else n_p
    tm = _pick_tile(n_p, min(tm_desired, tm_cap))

    # Â construction (normalize + transpose + cast + pad) stays inside the same
    # jit region as the kernels so XLA fuses it into ~one N^2 read + one write.
    a_norm = normalize_adjacency(adj)
    a_p = jnp.zeros((n_p, n_p), compute_dtype).at[:n, :n].set(a_norm.astype(compute_dtype))
    x_p = jnp.zeros((n_p, in_p), compute_dtype).at[:n, :in_size].set(x.astype(compute_dtype))
    # Weights / biases stay f32: tiny, VMEM-resident, and avoids an extra rounding
    # of the f32 aggregator before the projection epilogue.
    w1_p = jnp.zeros((in_p, hid_p), jnp.float32).at[:in_size, :hid_size].set(w1)
    b1_p = jnp.zeros((1, hid_p), jnp.float32).at[:, :hid_size].set(b1.reshape(1, -1))
    w2_p = jnp.zeros((hid_p, out_p), jnp.float32).at[:hid_size, :out_size].set(w2)
    b2_p = jnp.zeros((1, out_p), jnp.float32).at[:, :out_size].set(b2.reshape(1, -1))

    # TODO(synk): training-mode Dropout(0.5) would draw a mask with pltpu.prng_random_bits.

    # Fused layer 1 + layer-2 projection:   P = relu(Â @ X @ W1 + b1) @ W2
    p = _fused_layer1(a_p, x_p, w1_p, b1_p, w2_p, tm=tm, tk_desired=tk_desired,
                      out_dtype=compute_dtype, operand_resident=operand_resident)

    # Layer-2 aggregation + bias:           H2 = Â @ P + b2
    h2 = _layer2_agg(a_p, p, b2_p, tm=tm, tk_desired=tk_desired,
                     out_dtype=jnp.float32, operand_resident=operand_resident)

    return h2[:n, :out_size]


def glorot(key, shape):
    fan_in, fan_out = shape
    limit = (6.0 / (fan_in + fan_out)) ** 0.5
    return jax.random.uniform(key, shape, jnp.float32, -limit, limit)


def _reference(adj, x, w1, b1, w2, b2):
    hp = jax.lax.Precision.HIGHEST
    a_norm = normalize_adjacency(adj)
    h1 = jnp.maximum(jnp.dot(a_norm, jnp.dot(x, w1, precision=hp), precision=hp)
                     + b1[None, :], 0.0)
    return jnp.dot(a_norm, jnp.dot(h1, w2, precision=hp), precision=hp) + b2[None, :]


# --------------------------------------------------------------------------- #
# Demo / correctness checks
# --------------------------------------------------------------------------- #
if __name__ == "__main__":
    in_size, hid_size, out_size = 8, 32, 4
    key = jax.random.PRNGKey(0)
    k_adj, k_x, k_w1, k_w2, k_adj2, k_x2 = jax.random.split(key, 6)

    # Glorot weights, zero biases (DGL GraphConv defaults).
    w1 = glorot(k_w1, (in_size, hid_size))
    b1 = jnp.zeros((hid_size,), jnp.float32)
    w2 = glorot(k_w2, (hid_size, out_size))
    b2 = jnp.zeros((out_size,), jnp.float32)

    # --- Tests 1/2: N=200 -> n_p=256, tm=128, single-pass path (grid=(2,)). ---
    N = 200
    adj = (jax.random.uniform(k_adj, (N, N)) < 0.05).astype(jnp.float32)
    x = jax.random.normal(k_x, (N, in_size), jnp.float32)
    ref = _reference(adj, x, w1, b1, w2, b2)

    out_f32 = jax.block_until_ready(
        jax.jit(functools.partial(gcn_forward, compute_dtype=jnp.float32))(
            adj, x, w1, b1, w2, b2))
    assert out_f32.shape == (N, out_size)
    assert jnp.allclose(out_f32, ref, atol=2e-4, rtol=2e-4), "f32 single-pass mismatch"

    out_bf16 = jax.block_until_ready(
        jax.jit(functools.partial(gcn_forward, compute_dtype=jnp.bfloat16))(
            adj, x, w1, b1, w2, b2))
    assert jnp.allclose(out_bf16, ref, atol=5e-2, rtol=5e-2), "bf16 single-pass mismatch"

    # --- Tests 3/4: N=700 -> n_p=768, tm=tk=256, k-reduction path (grid=(3,3)),
    #     once with resident feature operand, once forced to the streamed path. ---
    N2 = 700
    adj2 = (jax.random.uniform(k_adj2, (N2, N2)) < 0.02).astype(jnp.float32)
    x2 = jax.random.normal(k_x2, (N2, in_size), jnp.float32)
    ref2 = _reference(adj2, x2, w1, b1, w2, b2)

    out_res = jax.block_until_ready(
        jax.jit(functools.partial(gcn_forward, compute_dtype=jnp.float32,
                                  tm_desired=256, tk_desired=256))(
            adj2, x2, w1, b1, w2, b2))
    assert jnp.allclose(out_res, ref2, atol=1e-3, rtol=1e-3), "k-path (resident) mismatch"

    out_stream = jax.block_until_ready(
        jax.jit(functools.partial(gcn_forward, compute_dtype=jnp.float32,
                                  tm_desired=256, tk_desired=256,
                                  operand_resident=False))(
            adj2, x2, w1, b1, w2, b2))
    assert jnp.allclose(out_stream, ref2, atol=1e-3, rtol=1e-3), "k-path (streamed) mismatch"

    print("KERNEL_OK")
</pallas_src>

<mosaic_0001>
module attributes {stable_mosaic.version = 11 : i64} {
  func.func @_layer1_single_kernel(%arg0: i32, %arg1: memref<128x256xf32, #tpu.memory_space<vmem>>, %arg2: memref<256x128xf32, #tpu.memory_space<vmem>>, %arg3: memref<128x128xf32, #tpu.memory_space<vmem>>, %arg4: memref<1x128xf32, #tpu.memory_space<vmem>>, %arg5: memref<128x128xf32, #tpu.memory_space<vmem>>, %arg6: memref<128x128xf32, #tpu.memory_space<vmem>>) attributes {dimension_semantics = [#tpu.dimension_semantics<parallel>], iteration_bounds = array<i64: 2>, scalar_prefetch = 0 : i64, scratch_operands = 0 : i64, tpu.core_type = #tpu.core_type<tc>, window_params = [{transform_indices = @transform_0, window_bounds = array<i64: 128, 256>}, {pipeline_mode = #tpu.pipeline_mode<synchronous>, transform_indices = @transform_1, window_bounds = array<i64: 256, 128>}, {pipeline_mode = #tpu.pipeline_mode<synchronous>, transform_indices = @transform_2, window_bounds = array<i64: 128, 128>}, {pipeline_mode = #tpu.pipeline_mode<synchronous>, transform_indices = @transform_3, window_bounds = array<i64: 1, 128>}, {pipeline_mode = #tpu.pipeline_mode<synchronous>, transform_indices = @transform_4, window_bounds = array<i64: 128, 128>}, {transform_indices = @transform_5, window_bounds = array<i64: 128, 128>}]} {
    %c0 = arith.constant 0 : index
    %c0_0 = arith.constant 0 : index
    %0 = vector.load %arg1[%c0, %c0_0] : memref<128x256xf32, #tpu.memory_space<vmem>>, vector<128x256xf32>
    %c0_1 = arith.constant 0 : index
    %c0_2 = arith.constant 0 : index
    %1 = vector.load %arg2[%c0_1, %c0_2] : memref<256x128xf32, #tpu.memory_space<vmem>>, vector<256x128xf32>
    %cst = arith.constant dense<0.000000e+00> : vector<128x128xf32>
    %2 = tpu.matmul %0, %1, %cst {dimension_numbers = #tpu.dot_dimension_numbers<[1], [0], [0], [1], [0, 0, 1, 1], [], []>} : vector<128x256xf32>, vector<256x128xf32>, vector<128x128xf32> -> vector<128x128xf32>
    %c0_3 = arith.constant 0 : index
    %c0_4 = arith.constant 0 : index
    %3 = vector.load %arg3[%c0_3, %c0_4] : memref<128x128xf32, #tpu.memory_space<vmem>>, vector<128x128xf32>
    %cst_5 = arith.constant dense<0.000000e+00> : vector<128x128xf32>
    %4 = tpu.matmul %2, %3, %cst_5 {dimension_numbers = #tpu.dot_dimension_numbers<[1], [0], [0], [1], [0, 0, 1, 1], [], []>} : vector<128x128xf32>, vector<128x128xf32>, vector<128x128xf32> -> vector<128x128xf32>
    %c0_6 = arith.constant 0 : index
    %c0_7 = arith.constant 0 : index
    %5 = vector.load %arg4[%c0_6, %c0_7] : memref<1x128xf32, #tpu.memory_space<vmem>>, vector<1x128xf32>
    %6 = vector.broadcast %5 : vector<1x128xf32> to vector<128x128xf32>
    %7 = arith.addf %4, %6 : vector<128x128xf32>
    %cst_8 = arith.constant 0.000000e+00 : f32
    %8 = vector.broadcast %cst_8 : f32 to vector<128x128xf32>
    %9 = arith.maximumf %7, %8 : vector<128x128xf32>
    %c0_9 = arith.constant 0 : index
    %c0_10 = arith.constant 0 : index
    %10 = vector.load %arg5[%c0_9, %c0_10] : memref<128x128xf32, #tpu.memory_space<vmem>>, vector<128x128xf32>
    %cst_11 = arith.constant dense<0.000000e+00> : vector<128x128xf32>
    %11 = tpu.matmul %9, %10, %cst_11 {dimension_numbers = #tpu.dot_dimension_numbers<[1], [0], [0], [1], [0, 0, 1, 1], [], []>} : vector<128x128xf32>, vector<128x128xf32>, vector<128x128xf32> -> vector<128x128xf32>
    %c0_12 = arith.constant 0 : index
    %c0_13 = arith.constant 0 : index
    %12 = vector.load %arg6[%c0_12, %c0_13] : memref<128x128xf32, #tpu.memory_space<vmem>>, vector<128x128xf32>
    tpu.vector_store %arg6[%c0_12, %c0_13], %11 {strides = array<i32>} : memref<128x128xf32, #tpu.memory_space<vmem>>, vector<128x128xf32>,
    return
  }
  func.func @transform_0(%arg0: i32) -> (i32, i32) {
    %c0_i32 = arith.constant 0 : i32
    %c0_i32_0 = arith.constant 0 : i32
    return %arg0, %c0_i32 : i32, i32
  }
  func.func @transform_1(%arg0: i32) -> (i32, i32) {
    %c0_i32 = arith.constant 0 : i32
    %c0_i32_0 = arith.constant 0 : i32
    %c0_i32_1 = arith.constant 0 : i32
    return %c0_i32, %c0_i32_0 : i32, i32
  }
  func.func @transform_2(%arg0: i32) -> (i32, i32) {
    %c0_i32 = arith.constant 0 : i32
    %c0_i32_0 = arith.constant 0 : i32
    %c0_i32_1 = arith.constant 0 : i32
    return %c0_i32, %c0_i32_0 : i32, i32
  }
  func.func @transform_3(%arg0: i32) -> (i32, i32) {
    %c0_i32 = arith.constant 0 : i32
    %c0_i32_0 = arith.constant 0 : i32
    %c0_i32_1 = arith.constant 0 : i32
    return %c0_i32, %c0_i32_0 : i32, i32
  }
  func.func @transform_4(%arg0: i32) -> (i32, i32) {
    %c0_i32 = arith.constant 0 : i32
    %c0_i32_0 = arith.constant 0 : i32
    %c0_i32_1 = arith.constant 0 : i32
    return %c0_i32, %c0_i32_0 : i32, i32
  }
  func.func @transform_5(%arg0: i32) -> (i32, i32) {
    %c0_i32 = arith.constant 0 : i32
    %c0_i32_0 = arith.constant 0 : i32
    return %arg0, %c0_i32 : i32, i32
  }
}

module attributes {stable_mosaic.version = 11 : i64} {
  func.func @_layer2_single_kernel(%arg0: i32, %arg1: memref<128x256xf32, #tpu.memory_space<vmem>>, %arg2: memref<256x128xf32, #tpu.memory_space<vmem>>, %arg3: memref<1x128xf32, #tpu.memory_space<vmem>>, %arg4: memref<128x128xf32, #tpu.memory_space<vmem>>) attributes {dimension_semantics = [#tpu.dimension_semantics<parallel>], iteration_bounds = array<i64: 2>, scalar_prefetch = 0 : i64, scratch_operands = 0 : i64, tpu.core_type = #tpu.core_type<tc>, window_params = [{transform_indices = @transform_0, window_bounds = array<i64: 128, 256>}, {pipeline_mode = #tpu.pipeline_mode<synchronous>, transform_indices = @transform_1, window_bounds = array<i64: 256, 128>}, {pipeline_mode = #tpu.pipeline_mode<synchronous>, transform_indices = @transform_2, window_bounds = array<i64: 1, 128>}, {transform_indices = @transform_3, window_bounds = array<i64: 128, 128>}]} {
    %c0 = arith.constant 0 : index
    %c0_0 = arith.constant 0 : index
    %0 = vector.load %arg1[%c0, %c0_0] : memref<128x256xf32, #tpu.memory_space<vmem>>, vector<128x256xf32>
    %c0_1 = arith.constant 0 : index
    %c0_2 = arith.constant 0 : index
    %1 = vector.load %arg2[%c0_1, %c0_2] : memref<256x128xf32, #tpu.memory_space<vmem>>, vector<256x128xf32>
    %cst = arith.constant dense<0.000000e+00> : vector<128x128xf32>
    %2 = tpu.matmul %0, %1, %cst {dimension_numbers = #tpu.dot_dimension_numbers<[1], [0], [0], [1], [0, 0, 1, 1], [], []>} : vector<128x256xf32>, vector<256x128xf32>, vector<128x128xf32> -> vector<128x128xf32>
    %c0_3 = arith.constant 0 : index
    %c0_4 = arith.constant 0 : index
    %3 = vector.load %arg3[%c0_3, %c0_4] : memref<1x128xf32, #tpu.memory_space<vmem>>, vector<1x128xf32>
    %4 = vector.broadcast %3 : vector<1x128xf32> to vector<128x128xf32>
    %5 = arith.addf %2, %4 : vector<128x128xf32>
    %c0_5 = arith.constant 0 : index
    %c0_6 = arith.constant 0 : index
    %6 = vector.load %arg4[%c0_5, %c0_6] : memref<128x128xf32, #tpu.memory_space<vmem>>, vector<128x128xf32>
    tpu.vector_store %arg4[%c0_5, %c0_6], %5 {strides = array<i32>} : memref<128x128xf32, #tpu.memory_space<vmem>>, vector<128x128xf32>,
    return
  }
  func.func @transform_0(%arg0: i32) -> (i32, i32) {
    %c0_i32 = arith.constant 0 : i32
    %c0_i32_0 = arith.constant 0 : i32
    return %arg0, %c0_i32 : i32, i32
  }
  func.func @transform_1(%arg0: i32) -> (i32, i32) {
    %c0_i32 = arith.constant 0 : i32
    %c0_i32_0 = arith.constant 0 : i32
    %c0_i32_1 = arith.constant 0 : i32
    return %c0_i32, %c0_i32_0 : i32, i32
  }
  func.func @transform_2(%arg0: i32) -> (i32, i32) {
    %c0_i32 = arith.constant 0 : i32
    %c0_i32_0 = arith.constant 0 : i32
    %c0_i32_1 = arith.constant 0 : i32
    return %c0_i32, %c0_i32_0 : i32, i32
  }
  func.func @transform_3(%arg0: i32) -> (i32, i32) {
    %c0_i32 = arith.constant 0 : i32
    %c0_i32_0 = arith.constant 0 : i32
    return %arg0, %c0_i32 : i32, i32
  }
}

</mosaic_0001>

<llo_original>
// kernel: gcn_forward.3
$region0: #{gcn_forward.3}
  #allocation0 [shape = 'u32[]', space=smem, size = 0x4, offset = 0x4, fixed_abs, tag = 'smem constant byte address 0x4 - core index']
  #allocation1 [shape = 'u32[72,128]{1,0:T(1,128)}', space=vmem, size = 0x9000, scoped, tag = 'internal scratch']
  %s0 = inlined_call_operand.vmem [shape: f32[256,256], index: 0, kind: input, shape index: {}]
  %s1 = inlined_call_operand.vmem [shape: f32[256,128], index: 1, kind: input, shape index: {}]
  %s2 = inlined_call_operand.vmem [shape: f32[1,128], index: 2, kind: input, shape index: {}]
  %s3 = inlined_call_operand.vmem [shape: f32[256,128], index: 3, kind: output, shape index: {}]
  %s4 = sld [smem:[#allocation0]]
  $region45: #{gcn_forward.3} parent=0
    _
  %s6 = ssub.s32 1, %s4
  %s7 = scalar_select 0, %s6, %s4
  loop: start=0, step=1, limit=4
  $region2: #{gcn_forward.3} parent=0 // loop_pre_header
    _
  $region3: #{gcn_forward.3} parent=0 // loop_header
    %s9 = sphi 0, %s13
    %p10 = scmp.ge.s32.totalorder %s9, 4
    %s19 = sphi 0, %s21
    %s22 = sphi 0, %s19
    %s23 = sphi 0, %s22
    %s39 = sphi 0, %s23
    %s43 = sphi 0, %s43
    %s45 = sphi 0, %s43
    %s46 = sphi 0, %s45
    %s60 = sphi 0, %s46
    %s64 = sphi 0, %s64
    %s66 = sphi 0, %s64
    %s67 = sphi 0, %s66
    %s81 = sphi 0, %s67
    %s87 = sphi 0, %s89
    %s90 = sphi 0, %s87
    %s91 = sphi 0, %s90
    %s107 = sphi 0, %s91
  $region4: #{gcn_forward.3} parent=0 // loop_header_branch
    %12 = sbr.rel (%p10) target = $region8
  $region5: #{gcn_forward.3} parent=0 // loop_body
    %s14 = ssub.s32 %s9, 1
    %s15 = ssub.s32 %s9, 2
    %s16 = sadd.s32 %s9, 1
    %s17 = ssub.s32 %s9, %s16
    %p18 = scmp.eq.s32.totalorder %s17, 0
    %s20 = sadd.s32 %s19, 1
    %s21 = scalar_select %p18, %s19, %s20
    %p24 = pneg %p18
    %p25 = scmp.eq.s32.totalorder %s9, 1
    %p26 = por %p24, %p25
    %p27 = scmp.ne.s32.totalorder %s19, %s22
    %p28 = scmp.eq.s32.totalorder %s9, 0
    %p29 = por %p27, %p28
    %p30 = scmp.ne.s32.totalorder %s19, %s22
    %p31 = scmp.eq.s32.totalorder %s14, 1
    %p32 = por %p30, %p31
    %p33 = scmp.ne.s32.totalorder %s22, %s23
    %p34 = scmp.eq.s32.totalorder %s14, 0
    %p35 = por %p33, %p34
    %p36 = scmp.ne.s32.totalorder %s22, %s23
    %p37 = scmp.eq.s32.totalorder %s15, 1
    %p38 = por %p36, %p37
    %p40 = scmp.ne.s32.totalorder %s23, %s39
    %p41 = scmp.eq.s32.totalorder %s15, 0
    %p42 = por %p40, %p41
    %s44 = sadd.s32 %s43, 1
    %p47 = scmp.eq.s32.totalorder %s9, 1
    %p48 = scmp.ne.s32.totalorder %s43, %s45
    %p49 = scmp.eq.s32.totalorder %s9, 0
    %p50 = por %p48, %p49
    %p51 = scmp.ne.s32.totalorder %s43, %s45
    %p52 = scmp.eq.s32.totalorder %s14, 1
    %p53 = por %p51, %p52
    %p54 = scmp.ne.s32.totalorder %s45, %s46
    %p55 = scmp.eq.s32.totalorder %s14, 0
    %p56 = por %p54, %p55
    %p57 = scmp.ne.s32.totalorder %s45, %s46
    %p58 = scmp.eq.s32.totalorder %s15, 1
    %p59 = por %p57, %p58
    %p61 = scmp.ne.s32.totalorder %s46, %s60
    %p62 = scmp.eq.s32.totalorder %s15, 0
    %p63 = por %p61, %p62
    %s65 = sadd.s32 %s64, 1
    %p68 = scmp.eq.s32.totalorder %s9, 1
    %p69 = scmp.ne.s32.totalorder %s64, %s66
    %p70 = scmp.eq.s32.totalorder %s9, 0
    %p71 = por %p69, %p70
    %p72 = scmp.ne.s32.totalorder %s64, %s66
    %p73 = scmp.eq.s32.totalorder %s14, 1
    %p74 = por %p72, %p73
    %p75 = scmp.ne.s32.totalorder %s66, %s67
    %p76 = scmp.eq.s32.totalorder %s14, 0
    %p77 = por %p75, %p76
    %p78 = scmp.ne.s32.totalorder %s66, %s67
    %p79 = scmp.eq.s32.totalorder %s15, 1
    %p80 = por %p78, %p79
    %p82 = scmp.ne.s32.totalorder %s67, %s81
    %p83 = scmp.eq.s32.totalorder %s15, 0
    %p84 = por %p82, %p83
    %s85 = ssub.s32 %s9, %s16
    %p86 = scmp.eq.s32.totalorder %s85, 0
    %s88 = sadd.s32 %s87, 1
    %s89 = scalar_select %p86, %s87, %s88
    %p92 = pneg %p86
    %p93 = scmp.eq.s32.totalorder %s9, 1
    %p94 = por %p92, %p93
    %p95 = scmp.ne.s32.totalorder %s87, %s90
    %p96 = scmp.eq.s32.totalorder %s9, 0
    %p97 = por %p95, %p96
    %p98 = scmp.ne.s32.totalorder %s87, %s90
    %p99 = scmp.eq.s32.totalorder %s14, 1
    %p100 = por %p98, %p99
    %p101 = scmp.ne.s32.totalorder %s90, %s91
    %p102 = scmp.eq.s32.totalorder %s14, 0
    %p103 = por %p101, %p102
    %p104 = scmp.ne.s32.totalorder %s90, %s91
    %p105 = scmp.eq.s32.totalorder %s15, 1
    %p106 = por %p104, %p105
    %p108 = scmp.ne.s32.totalorder %s91, %s107
    %p109 = scmp.eq.s32.totalorder %s15, 0
    %p110 = por %p108, %p109
    %p111 = scmp.le.s32.totalorder 1, %s9
    %p112 = scmp.lt.s32.totalorder %s9, 3
    %p113 = pnand %p111, %p112
    %p114 = pneg %p113
    // Predicated region
    $region9: #{gcn_forward.3} parent=5 // pred_check
      _
    $region10: #{gcn_forward.3} parent=5 // pred_check_branch
      %116 = sbr.rel (%p113) target = $region12
    $region11: #{gcn_forward.3} parent=5 // pred_region
      %s117 = ssub.s32 %s9, 1
      // Predicated region
      $region13: #{gcn_forward.3} parent=11 // pred_check
        %p118 = pneg %p56
      $region14: #{gcn_forward.3} parent=11 // pred_check_branch
        %120 = sbr.rel (%p118) target = $region16
      $region15: #{gcn_forward.3} parent=11 // pred_region
        _
      $region16: #{gcn_forward.3} parent=11 // pred_fallthru
        _
      // Predicated region
      $region17: #{gcn_forward.3} parent=11 // pred_check
        %p121 = pneg %p77
      $region18: #{gcn_forward.3} parent=11 // pred_check_branch
        %123 = sbr.rel (%p121) target = $region20
      $region19: #{gcn_forward.3} parent=11 // pred_region
        _
      $region20: #{gcn_forward.3} parent=11 // pred_fallthru
        _
    $region12: #{gcn_forward.3} parent=5 // pred_fallthru
      _
    %p124 = scmp.lt.s32.totalorder %s9, 2
    // Predicated region
    $region21: #{gcn_forward.3} parent=5 // pred_check
      %p125 = pneg %p124
    $region22: #{gcn_forward.3} parent=5 // pred_check_branch
      %127 = sbr.rel (%p125) target = $region24
    $region23: #{gcn_forward.3} parent=5 // pred_region
      // Predicated region
      $region25: #{gcn_forward.3} parent=23 // pred_check
        %p128 = pneg %p29
      $region26: #{gcn_forward.3} parent=23 // pred_check_branch
        %130 = sbr.rel (%p128) target = $region28
      $region27: #{gcn_forward.3} parent=23 // pred_region
        %s131 = smul.u32 16, %s9
        %p132 = scmp.lt.s32.totalorder %s131, 31
        %s133 = scalar_select %p132, %s131, 31
        %s134 = smul.addr %s133, 2
        %s135 = smul.addr %s134, 8
        %s136 = scalar_lea.vmem %s0, %s135
        %s137 = smul.u32 16, %s9
      $region28: #{gcn_forward.3} parent=23 // pred_fallthru
        _
    $region24: #{gcn_forward.3} parent=5 // pred_fallthru
      _
    %p138 = scmp.le.s32.totalorder 1, %s9
    %p139 = scmp.lt.s32.totalorder %s9, 3
    %p140 = pnand %p138, %p139
    %p141 = pneg %p140
    // Predicated region
    $region29: #{gcn_forward.3} parent=5 // pred_check
      _
    $region30: #{gcn_forward.3} parent=5 // pred_check_branch
      %143 = sbr.rel (%p140) target = $region32
    $region31: #{gcn_forward.3} parent=5 // pred_region
      %s144 = ssub.s32 %s9, 1
      %s145 = smul.u32 16, %s14
      %p146 = scmp.lt.s32.totalorder %s145, 31
      %s147 = scalar_select %p146, %s145, 31
      %s148 = smul.addr %s147, 2
      %s149 = smul.addr %s148, 8
      %s150 = scalar_lea.vmem %s0, %s149
      %p151 = pneg %p35
      %p152 = pneg %p32
      %p153 = pneg %p56
      %p154 = pneg %p53
      %p155 = pneg %p77
      %p156 = pneg %p74
      %p157 = pneg %p103
      %p158 = pneg %p100
      %s159 = smul.u32 16, %s14
      %p160 = scmp.lt.s32.totalorder %s159, 31
      %s161 = scalar_select %p160, %s159, 31
      %s162 = smul.addr %s161, 8
      %s163 = scalar_lea.vmem %s3, %s162
      %s164 = smul.u32 16, %s14
      %p165 = scmp.lt.s32.totalorder %s164, 31
      %s166 = scalar_select %p165, %s164, 31
      %s167 = smul.addr %s166, 2
      %s168 = smul.addr %s167, 8
      %s169 = scalar_lea.vmem %s0, %s168
      %s170 = smul.u32 16, %s14
      %s171 = smul.u32 16, %s14
      %p172 = scmp.lt.s32.totalorder %s171, 31
      %s173 = scalar_select %p172, %s171, 31
      %s174 = smul.addr %s173, 8
      %s175 = scalar_lea.vmem %s3, %s174
      %s176 = smul.u32 16, %s14
      %v177 = vld [vmem:[%s169] sm:$0xff]
      %v178 = vld [vmem:[%s169 + $0x8] sm:$0xff]
      %v179 = vld [vmem:[%s169 + $0x10] sm:$0xff]
      %v180 = vld [vmem:[%s169 + $0x18] sm:$0xff]
      %v181 = vld [vmem:[%s169 + $0x20] sm:$0xff]
      %v182 = vld [vmem:[%s169 + $0x28] sm:$0xff]
      %v183 = vld [vmem:[%s169 + $0x30] sm:$0xff]
      %v184 = vld [vmem:[%s169 + $0x38] sm:$0xff]
      %v185 = vld [vmem:[%s169 + $0x40] sm:$0xff]
      %v186 = vld [vmem:[%s169 + $0x48] sm:$0xff]
      %v187 = vld [vmem:[%s169 + $0x50] sm:$0xff]
      %v188 = vld [vmem:[%s169 + $0x58] sm:$0xff]
      %v189 = vld [vmem:[%s169 + $0x60] sm:$0xff]
      %v190 = vld [vmem:[%s169 + $0x68] sm:$0xff]
      %v191 = vld [vmem:[%s169 + $0x70] sm:$0xff]
      %v192 = vld [vmem:[%s169 + $0x78] sm:$0xff]
      %v193 = vld [vmem:[%s169 + $0x80] sm:$0xff]
      %v194 = vld [vmem:[%s169 + $0x88] sm:$0xff]
      %v195 = vld [vmem:[%s169 + $0x90] sm:$0xff]
      %v196 = vld [vmem:[%s169 + $0x98] sm:$0xff]
      %v197 = vld [vmem:[%s169 + $0xa0] sm:$0xff]
      %v198 = vld [vmem:[%s169 + $0xa8] sm:$0xff]
      %v199 = vld [vmem:[%s169 + $0xb0] sm:$0xff]
      %v200 = vld [vmem:[%s169 + $0xb8] sm:$0xff]
      %v201 = vld [vmem:[%s169 + $0xc0] sm:$0xff]
      %v202 = vld [vmem:[%s169 + $0xc8] sm:$0xff]
      %v203 = vld [vmem:[%s169 + $0xd0] sm:$0xff]
      %v204 = vld [vmem:[%s169 + $0xd8] sm:$0xff]
      %v205 = vld [vmem:[%s169 + $0xe0] sm:$0xff]
      %v206 = vld [vmem:[%s169 + $0xe8] sm:$0xff]
      %v207 = vld [vmem:[%s169 + $0xf0] sm:$0xff]
      %v208 = vld [vmem:[%s169 + $0xf8] sm:$0xff]
      %v209 = vld [vmem:[%s1] sm:$0xff]
      %v210 = vld [vmem:[%s1 + $0x8] sm:$0xff]
      %v211 = vld [vmem:[%s1 + $0x10] sm:$0xff]
      %v212 = vld [vmem:[%s1 + $0x18] sm:$0xff]
      %v213 = vld [vmem:[%s1 + $0x20] sm:$0xff]
      %v214 = vld [vmem:[%s1 + $0x28] sm:$0xff]
      %v215 = vld [vmem:[%s1 + $0x30] sm:$0xff]
      %v216 = vld [vmem:[%s1 + $0x38] sm:$0xff]
      %v217 = vld [vmem:[%s1 + $0x40] sm:$0xff]
      %v218 = vld [vmem:[%s1 + $0x48] sm:$0xff]
      %v219 = vld [vmem:[%s1 + $0x50] sm:$0xff]
      %v220 = vld [vmem:[%s1 + $0x58] sm:$0xff]
      %v221 = vld [vmem:[%s1 + $0x60] sm:$0xff]
      %v222 = vld [vmem:[%s1 + $0x68] sm:$0xff]
      %v223 = vld [vmem:[%s1 + $0x70] sm:$0xff]
      %v224 = vld [vmem:[%s1 + $0x78] sm:$0xff]
      %v225 = vld [vmem:[%s1 + $0x80] sm:$0xff]
      %v226 = vld [vmem:[%s1 + $0x88] sm:$0xff]
      %v227 = vld [vmem:[%s1 + $0x90] sm:$0xff]
      %v228 = vld [vmem:[%s1 + $0x98] sm:$0xff]
      %v229 = vld [vmem:[%s1 + $0xa0] sm:$0xff]
      %v230 = vld [vmem:[%s1 + $0xa8] sm:$0xff]
      %v231 = vld [vmem:[%s1 + $0xb0] sm:$0xff]
      %v232 = vld [vmem:[%s1 + $0xb8] sm:$0xff]
      %v233 = vld [vmem:[%s1 + $0xc0] sm:$0xff]
      %v234 = vld [vmem:[%s1 + $0xc8] sm:$0xff]
      %v235 = vld [vmem:[%s1 + $0xd0] sm:$0xff]
      %v236 = vld [vmem:[%s1 + $0xd8] sm:$0xff]
      %v237 = vld [vmem:[%s1 + $0xe0] sm:$0xff]
      %v238 = vld [vmem:[%s1 + $0xe8] sm:$0xff]
      %v239 = vld [vmem:[%s1 + $0xf0] sm:$0xff]
      %v240 = vld [vmem:[%s1 + $0xf8] sm:$0xff]
      %v241 = vld [vmem:[%s2] sm:$0x1]
      %v243 = vperm.slane %v241, 0
      %245 = vmatpush.msra.mxu0 %v224
      %246 = vmatpush.msra.mxu0 %v223
      %247 = vmatpush.msra.mxu0 %v222
      %248 = vmatpush.msra.mxu0 %v221
      %249 = vmatpush.msra.mxu0 %v220
      %250 = vmatpush.msra.mxu0 %v219
      %251 = vmatpush.msra.mxu0 %v218
      %252 = vmatpush.msra.mxu0 %v217
      %253 = vmatpush.msra.mxu0 %v216
      %254 = vmatpush.msra.mxu0 %v215
      %255 = vmatpush.msra.mxu0 %v214
      %256 = vmatpush.msra.mxu0 %v213
      %257 = vmatpush.msra.mxu0 %v212
      %258 = vmatpush.msra.mxu0 %v211
      %259 = vmatpush.msra.mxu0 %v210
      %260 = vmatpush.msra.mxu0 %v209
      %261 = vmatmul.f32.gmra.mxu0 %v177
      %v262 = vpop.f32.mrf.mxu0
      %v263 = vadd.f32 %v243, %v262
      %264 = vmatmul.f32.gmra.mxu0 %v179
      %v265 = vpop.f32.mrf.mxu0
      %v266 = vadd.f32 %v243, %v265
      %267 = vmatmul.f32.gmra.mxu0 %v181
      %v268 = vpop.f32.mrf.mxu0
      %v269 = vadd.f32 %v243, %v268
      %270 = vmatmul.f32.gmra.mxu0 %v183
      %v271 = vpop.f32.mrf.mxu0
      %v272 = vadd.f32 %v243, %v271
      %273 = vmatmul.f32.gmra.mxu0 %v185
      %v274 = vpop.f32.mrf.mxu0
      %v275 = vadd.f32 %v243, %v274
      %276 = vmatmul.f32.gmra.mxu0 %v187
      %v277 = vpop.f32.mrf.mxu0
      %v278 = vadd.f32 %v243, %v277
      %279 = vmatmul.f32.gmra.mxu0 %v189
      %v280 = vpop.f32.mrf.mxu0
      %v281 = vadd.f32 %v243, %v280
      %282 = vmatmul.f32.gmra.mxu0 %v191
      %v283 = vpop.f32.mrf.mxu0
      %v284 = vadd.f32 %v243, %v283
      %285 = vmatmul.f32.gmra.mxu0 %v193
      %v286 = vpop.f32.mrf.mxu0
      %v287 = vadd.f32 %v243, %v286
      %288 = vmatmul.f32.gmra.mxu0 %v195
      %v289 = vpop.f32.mrf.mxu0
      %v290 = vadd.f32 %v243, %v289
      %291 = vmatmul.f32.gmra.mxu0 %v197
      %v292 = vpop.f32.mrf.mxu0
      %v293 = vadd.f32 %v243, %v292
      %294 = vmatmul.f32.gmra.mxu0 %v199
      %v295 = vpop.f32.mrf.mxu0
      %v296 = vadd.f32 %v243, %v295
      %297 = vmatmul.f32.gmra.mxu0 %v201
      %v298 = vpop.f32.mrf.mxu0
      %v299 = vadd.f32 %v243, %v298
      %300 = vmatmul.f32.gmra.mxu0 %v203
      %v301 = vpop.f32.mrf.mxu0
      %v302 = vadd.f32 %v243, %v301
      %303 = vmatmul.f32.gmra.mxu0 %v205
      %v304 = vpop.f32.mrf.mxu0
      %v305 = vadd.f32 %v243, %v304
      %306 = vmatmul.f32.gmra.mxu0 %v207
      %v307 = vpop.f32.mrf.mxu0
      %v308 = vadd.f32 %v243, %v307
      %309 = vdwg.mxu0
      %310 = vmatpush.msra.mxu0 %v240
      %311 = vmatpush.msra.mxu0 %v239
      %312 = vmatpush.msra.mxu0 %v238
      %313 = vmatpush.msra.mxu0 %v237
      %314 = vmatpush.msra.mxu0 %v236
      %315 = vmatpush.msra.mxu0 %v235
      %316 = vmatpush.msra.mxu0 %v234
      %317 = vmatpush.msra.mxu0 %v233
      %318 = vmatpush.msra.mxu0 %v232
      %319 = vmatpush.msra.mxu0 %v231
      %320 = vmatpush.msra.mxu0 %v230
      %321 = vmatpush.msra.mxu0 %v229
      %322 = vmatpush.msra.mxu0 %v228
      %323 = vmatpush.msra.mxu0 %v227
      %324 = vmatpush.msra.mxu0 %v226
      %325 = vmatpush.msra.mxu0 %v225
      %326 = vmatmul.f32.gmra.mxu0 %v178
      %v327 = vpop.f32.mrf.mxu0
      %v328 = vadd.f32 %v263, %v327
      %329 = vmatmul.f32.gmra.mxu0 %v180
      %v330 = vpop.f32.mrf.mxu0
      %v331 = vadd.f32 %v266, %v330
      %332 = vmatmul.f32.gmra.mxu0 %v182
      %v333 = vpop.f32.mrf.mxu0
      %v334 = vadd.f32 %v269, %v333
      %335 = vmatmul.f32.gmra.mxu0 %v184
      %v336 = vpop.f32.mrf.mxu0
      %v337 = vadd.f32 %v272, %v336
      %338 = vmatmul.f32.gmra.mxu0 %v186
      %v339 = vpop.f32.mrf.mxu0
      %v340 = vadd.f32 %v275, %v339
      %341 = vmatmul.f32.gmra.mxu0 %v188
      %v342 = vpop.f32.mrf.mxu0
      %v343 = vadd.f32 %v278, %v342
      %344 = vmatmul.f32.gmra.mxu0 %v190
      %v345 = vpop.f32.mrf.mxu0
      %v346 = vadd.f32 %v281, %v345
      %347 = vmatmul.f32.gmra.mxu0 %v192
      %v348 = vpop.f32.mrf.mxu0
      %v349 = vadd.f32 %v284, %v348
      %350 = vmatmul.f32.gmra.mxu0 %v194
      %v351 = vpop.f32.mrf.mxu0
      %v352 = vadd.f32 %v287, %v351
      %353 = vmatmul.f32.gmra.mxu0 %v196
      %v354 = vpop.f32.mrf.mxu0
      %v355 = vadd.f32 %v290, %v354
      %356 = vmatmul.f32.gmra.mxu0 %v198
      %v357 = vpop.f32.mrf.mxu0
      %v358 = vadd.f32 %v293, %v357
      %359 = vmatmul.f32.gmra.mxu0 %v200
      %v360 = vpop.f32.mrf.mxu0
      %v361 = vadd.f32 %v296, %v360
      %362 = vmatmul.f32.gmra.mxu0 %v202
      %v363 = vpop.f32.mrf.mxu0
      %v364 = vadd.f32 %v299, %v363
      %365 = vmatmul.f32.gmra.mxu0 %v204
      %v366 = vpop.f32.mrf.mxu0
      %v367 = vadd.f32 %v302, %v366
      %368 = vmatmul.f32.gmra.mxu0 %v206
      %v369 = vpop.f32.mrf.mxu0
      %v370 = vadd.f32 %v305, %v369
      %371 = vmatmul.f32.gmra.mxu0 %v208
      %v372 = vpop.f32.mrf.mxu0
      %v373 = vadd.f32 %v308, %v372
      %374 = vdwg.mxu0
      %375 = vst [vmem:[%s175] sm:$0xff] %v328
      %376 = vst [vmem:[%s175 + $0x8] sm:$0xff] %v331
      %377 = vst [vmem:[%s175 + $0x10] sm:$0xff] %v334
      %378 = vst [vmem:[%s175 + $0x18] sm:$0xff] %v337
      %379 = vst [vmem:[%s175 + $0x20] sm:$0xff] %v340
      %380 = vst [vmem:[%s175 + $0x28] sm:$0xff] %v343
      %381 = vst [vmem:[%s175 + $0x30] sm:$0xff] %v346
      %382 = vst [vmem:[%s175 + $0x38] sm:$0xff] %v349
      %383 = vst [vmem:[%s175 + $0x40] sm:$0xff] %v352
      %384 = vst [vmem:[%s175 + $0x48] sm:$0xff] %v355
      %385 = vst [vmem:[%s175 + $0x50] sm:$0xff] %v358
      %386 = vst [vmem:[%s175 + $0x58] sm:$0xff] %v361
      %387 = vst [vmem:[%s175 + $0x60] sm:$0xff] %v364
      %388 = vst [vmem:[%s175 + $0x68] sm:$0xff] %v367
      %389 = vst [vmem:[%s175 + $0x70] sm:$0xff] %v370
      %390 = vst [vmem:[%s175 + $0x78] sm:$0xff] %v373
      %s391 = smul.u32 16, %s14
      %p392 = scmp.lt.s32.totalorder %s391, 31
      %s393 = scalar_select %p392, %s391, 31
      %s394 = smul.addr %s393, 8
      %s395 = scalar_lea.vmem %s3, %s394
      // Predicated region
      $region33: #{gcn_forward.3} parent=31 // pred_check
        %p396 = pneg %p100
      $region34: #{gcn_forward.3} parent=31 // pred_check_branch
        %398 = sbr.rel (%p396) target = $region36
      $region35: #{gcn_forward.3} parent=31 // pred_region
        %s399 = smul.u32 16, %s14
      $region36: #{gcn_forward.3} parent=31 // pred_fallthru
        _
    $region32: #{gcn_forward.3} parent=5 // pred_fallthru
      _
    %p400 = scmp.le.s32.totalorder 2, %s9
    // Predicated region
    $region37: #{gcn_forward.3} parent=5 // pred_check
      %p401 = pneg %p400
    $region38: #{gcn_forward.3} parent=5 // pred_check_branch
      %403 = sbr.rel (%p401) target = $region40
    $region39: #{gcn_forward.3} parent=5 // pred_region
      %s404 = ssub.s32 %s9, 2
      // Predicated region
      $region41: #{gcn_forward.3} parent=39 // pred_check
        %p405 = pneg %p106
      $region42: #{gcn_forward.3} parent=39 // pred_check_branch
        %407 = sbr.rel (%p405) target = $region44
      $region43: #{gcn_forward.3} parent=39 // pred_region
        %s408 = smul.u32 16, %s15
        %p409 = scmp.lt.s32.totalorder %s408, 31
        %s410 = scalar_select %p409, %s408, 31
        %s411 = smul.addr %s410, 8
        %s412 = scalar_lea.vmem %s3, %s411
      $region44: #{gcn_forward.3} parent=39 // pred_fallthru
        _
    $region40: #{gcn_forward.3} parent=5 // pred_fallthru
      _
  $region6: #{gcn_forward.3} parent=0 // loop_footer
    %s13 = sadd.s32 1, %s9
  $region7: #{gcn_forward.3} parent=0 // loop_footer_branch
    %8 = sbr.rel target = $region3
  $region8: #{gcn_forward.3} parent=0 // loop_exit
    _

// kernel: gcn_forward.2
$region0: #{gcn_forward.2}
  #allocation0 [shape = 'u32[]', space=smem, size = 0x4, offset = 0x4, fixed_abs, tag = 'smem constant byte address 0x4 - core index']
  #allocation1 [shape = 'u32[72,128]{1,0:T(1,128)}', space=vmem, size = 0x9000, scoped, tag = 'internal scratch']
  %s0 = inlined_call_operand.vmem [shape: f32[256,256], index: 0, kind: input, shape index: {}]
  %s1 = inlined_call_operand.vmem [shape: f32[256,128], index: 1, kind: input, shape index: {}]
  %s2 = inlined_call_operand.vmem [shape: f32[128,128], index: 2, kind: input, shape index: {}]
  %s3 = inlined_call_operand.vmem [shape: f32[1,128], index: 3, kind: input, shape index: {}]
  %s4 = inlined_call_operand.vmem [shape: f32[128,128], index: 4, kind: input, shape index: {}]
  %s5 = inlined_call_operand.vmem [shape: f32[256,128], index: 5, kind: output, shape index: {}]
  %s6 = sld [smem:[#allocation0]]
  $region53: #{gcn_forward.2} parent=0
    _
  %s8 = ssub.s32 1, %s6
  %s9 = scalar_select 0, %s8, %s6
  loop: start=0, step=1, limit=4
  $region2: #{gcn_forward.2} parent=0 // loop_pre_header
    _
  $region3: #{gcn_forward.2} parent=0 // loop_header
    %s11 = sphi 0, %s15
    %p12 = scmp.ge.s32.totalorder %s11, 4
    %s21 = sphi 0, %s23
    %s24 = sphi 0, %s21
    %s25 = sphi 0, %s24
    %s41 = sphi 0, %s25
    %s45 = sphi 0, %s45
    %s47 = sphi 0, %s45
    %s48 = sphi 0, %s47
    %s62 = sphi 0, %s48
    %s66 = sphi 0, %s66
    %s68 = sphi 0, %s66
    %s69 = sphi 0, %s68
    %s83 = sphi 0, %s69
    %s87 = sphi 0, %s87
    %s89 = sphi 0, %s87
    %s90 = sphi 0, %s89
    %s104 = sphi 0, %s90
    %s108 = sphi 0, %s108
    %s110 = sphi 0, %s108
    %s111 = sphi 0, %s110
    %s125 = sphi 0, %s111
    %s131 = sphi 0, %s133
    %s134 = sphi 0, %s131
    %s135 = sphi 0, %s134
    %s151 = sphi 0, %s135
  $region4: #{gcn_forward.2} parent=0 // loop_header_branch
    %14 = sbr.rel (%p12) target = $region8
  $region5: #{gcn_forward.2} parent=0 // loop_body
    %s16 = ssub.s32 %s11, 1
    %s17 = ssub.s32 %s11, 2
    %s18 = sadd.s32 %s11, 1
    %s19 = ssub.s32 %s11, %s18
    %p20 = scmp.eq.s32.totalorder %s19, 0
    %s22 = sadd.s32 %s21, 1
    %s23 = scalar_select %p20, %s21, %s22
    %p26 = pneg %p20
    %p27 = scmp.eq.s32.totalorder %s11, 1
    %p28 = por %p26, %p27
    %p29 = scmp.ne.s32.totalorder %s21, %s24
    %p30 = scmp.eq.s32.totalorder %s11, 0
    %p31 = por %p29, %p30
    %p32 = scmp.ne.s32.totalorder %s21, %s24
    %p33 = scmp.eq.s32.totalorder %s16, 1
    %p34 = por %p32, %p33
    %p35 = scmp.ne.s32.totalorder %s24, %s25
    %p36 = scmp.eq.s32.totalorder %s16, 0
    %p37 = por %p35, %p36
    %p38 = scmp.ne.s32.totalorder %s24, %s25
    %p39 = scmp.eq.s32.totalorder %s17, 1
    %p40 = por %p38, %p39
    %p42 = scmp.ne.s32.totalorder %s25, %s41
    %p43 = scmp.eq.s32.totalorder %s17, 0
    %p44 = por %p42, %p43
    %s46 = sadd.s32 %s45, 1
    %p49 = scmp.eq.s32.totalorder %s11, 1
    %p50 = scmp.ne.s32.totalorder %s45, %s47
    %p51 = scmp.eq.s32.totalorder %s11, 0
    %p52 = por %p50, %p51
    %p53 = scmp.ne.s32.totalorder %s45, %s47
    %p54 = scmp.eq.s32.totalorder %s16, 1
    %p55 = por %p53, %p54
    %p56 = scmp.ne.s32.totalorder %s47, %s48
    %p57 = scmp.eq.s32.totalorder %s16, 0
    %p58 = por %p56, %p57
    %p59 = scmp.ne.s32.totalorder %s47, %s48
    %p60 = scmp.eq.s32.totalorder %s17, 1
    %p61 = por %p59, %p60
    %p63 = scmp.ne.s32.totalorder %s48, %s62
    %p64 = scmp.eq.s32.totalorder %s17, 0
    %p65 = por %p63, %p64
    %s67 = sadd.s32 %s66, 1
    %p70 = scmp.eq.s32.totalorder %s11, 1
    %p71 = scmp.ne.s32.totalorder %s66, %s68
    %p72 = scmp.eq.s32.totalorder %s11, 0
    %p73 = por %p71, %p72
    %p74 = scmp.ne.s32.totalorder %s66, %s68
    %p75 = scmp.eq.s32.totalorder %s16, 1
    %p76 = por %p74, %p75
    %p77 = scmp.ne.s32.totalorder %s68, %s69
    %p78 = scmp.eq.s32.totalorder %s16, 0
    %p79 = por %p77, %p78
    %p80 = scmp.ne.s32.totalorder %s68, %s69
    %p81 = scmp.eq.s32.totalorder %s17, 1
    %p82 = por %p80, %p81
    %p84 = scmp.ne.s32.totalorder %s69, %s83
    %p85 = scmp.eq.s32.totalorder %s17, 0
    %p86 = por %p84, %p85
    %s88 = sadd.s32 %s87, 1
    %p91 = scmp.eq.s32.totalorder %s11, 1
    %p92 = scmp.ne.s32.totalorder %s87, %s89
    %p93 = scmp.eq.s32.totalorder %s11, 0
    %p94 = por %p92, %p93
    %p95 = scmp.ne.s32.totalorder %s87, %s89
    %p96 = scmp.eq.s32.totalorder %s16, 1
    %p97 = por %p95, %p96
    %p98 = scmp.ne.s32.totalorder %s89, %s90
    %p99 = scmp.eq.s32.totalorder %s16, 0
    %p100 = por %p98, %p99
    %p101 = scmp.ne.s32.totalorder %s89, %s90
    %p102 = scmp.eq.s32.totalorder %s17, 1
    %p103 = por %p101, %p102
    %p105 = scmp.ne.s32.totalorder %s90, %s104
    %p106 = scmp.eq.s32.totalorder %s17, 0
    %p107 = por %p105, %p106
    %s109 = sadd.s32 %s108, 1
    %p112 = scmp.eq.s32.totalorder %s11, 1
    %p113 = scmp.ne.s32.totalorder %s108, %s110
    %p114 = scmp.eq.s32.totalorder %s11, 0
    %p115 = por %p113, %p114
    %p116 = scmp.ne.s32.totalorder %s108, %s110
    %p117 = scmp.eq.s32.totalorder %s16, 1
    %p118 = por %p116, %p117
    %p119 = scmp.ne.s32.totalorder %s110, %s111
    %p120 = scmp.eq.s32.totalorder %s16, 0
    %p121 = por %p119, %p120
    %p122 = scmp.ne.s32.totalorder %s110, %s111
    %p123 = scmp.eq.s32.totalorder %s17, 1
    %p124 = por %p122, %p123
    %p126 = scmp.ne.s32.totalorder %s111, %s125
    %p127 = scmp.eq.s32.totalorder %s17, 0
    %p128 = por %p126, %p127
    %s129 = ssub.s32 %s11, %s18
    %p130 = scmp.eq.s32.totalorder %s129, 0
    %s132 = sadd.s32 %s131, 1
    %s133 = scalar_select %p130, %s131, %s132
    %p136 = pneg %p130
    %p137 = scmp.eq.s32.totalorder %s11, 1
    %p138 = por %p136, %p137
    %p139 = scmp.ne.s32.totalorder %s131, %s134
    %p140 = scmp.eq.s32.totalorder %s11, 0
    %p141 = por %p139, %p140
    %p142 = scmp.ne.s32.totalorder %s131, %s134
    %p143 = scmp.eq.s32.totalorder %s16, 1
    %p144 = por %p142, %p143
    %p145 = scmp.ne.s32.totalorder %s134, %s135
    %p146 = scmp.eq.s32.totalorder %s16, 0
    %p147 = por %p145, %p146
    %p148 = scmp.ne.s32.totalorder %s134, %s135
    %p149 = scmp.eq.s32.totalorder %s17, 1
    %p150 = por %p148, %p149
    %p152 = scmp.ne.s32.totalorder %s135, %s151
    %p153 = scmp.eq.s32.totalorder %s17, 0
    %p154 = por %p152, %p153
    %p155 = scmp.le.s32.totalorder 1, %s11
    %p156 = scmp.lt.s32.totalorder %s11, 3
    %p157 = pnand %p155, %p156
    %p158 = pneg %p157
    // Predicated region
    $region9: #{gcn_forward.2} parent=5 // pred_check
      _
    $region10: #{gcn_forward.2} parent=5 // pred_check_branch
      %160 = sbr.rel (%p157) target = $region12
    $region11: #{gcn_forward.2} parent=5 // pred_region
      %s161 = ssub.s32 %s11, 1
      // Predicated region
      $region13: #{gcn_forward.2} parent=11 // pred_check
        %p162 = pneg %p58
      $region14: #{gcn_forward.2} parent=11 // pred_check_branch
        %164 = sbr.rel (%p162) target = $region16
      $region15: #{gcn_forward.2} parent=11 // pred_region
        _
      $region16: #{gcn_forward.2} parent=11 // pred_fallthru
        _
      // Predicated region
      $region17: #{gcn_forward.2} parent=11 // pred_check
        %p165 = pneg %p79
      $region18: #{gcn_forward.2} parent=11 // pred_check_branch
        %167 = sbr.rel (%p165) target = $region20
      $region19: #{gcn_forward.2} parent=11 // pred_region
        _
      $region20: #{gcn_forward.2} parent=11 // pred_fallthru
        _
      // Predicated region
      $region21: #{gcn_forward.2} parent=11 // pred_check
        %p168 = pneg %p100
      $region22: #{gcn_forward.2} parent=11 // pred_check_branch
        %170 = sbr.rel (%p168) target = $region24
      $region23: #{gcn_forward.2} parent=11 // pred_region
        _
      $region24: #{gcn_forward.2} parent=11 // pred_fallthru
        _
      // Predicated region
      $region25: #{gcn_forward.2} parent=11 // pred_check
        %p171 = pneg %p121
      $region26: #{gcn_forward.2} parent=11 // pred_check_branch
        %173 = sbr.rel (%p171) target = $region28
      $region27: #{gcn_forward.2} parent=11 // pred_region
        _
      $region28: #{gcn_forward.2} parent=11 // pred_fallthru
        _
    $region12: #{gcn_forward.2} parent=5 // pred_fallthru
      _
    %p174 = scmp.lt.s32.totalorder %s11, 2
    // Predicated region
    $region29: #{gcn_forward.2} parent=5 // pred_check
      %p175 = pneg %p174
    $region30: #{gcn_forward.2} parent=5 // pred_check_branch
      %177 = sbr.rel (%p175) target = $region32
    $region31: #{gcn_forward.2} parent=5 // pred_region
      // Predicated region
      $region33: #{gcn_forward.2} parent=31 // pred_check
        %p178 = pneg %p31
      $region34: #{gcn_forward.2} parent=31 // pred_check_branch
        %180 = sbr.rel (%p178) target = $region36
      $region35: #{gcn_forward.2} parent=31 // pred_region
        %s181 = smul.u32 16, %s11
        %p182 = scmp.lt.s32.totalorder %s181, 31
        %s183 = scalar_select %p182, %s181, 31
        %s184 = smul.addr %s183, 2
        %s185 = smul.addr %s184, 8
        %s186 = scalar_lea.vmem %s0, %s185
        %s187 = smul.u32 16, %s11
      $region36: #{gcn_forward.2} parent=31 // pred_fallthru
        _
    $region32: #{gcn_forward.2} parent=5 // pred_fallthru
      _
    %p188 = scmp.le.s32.totalorder 1, %s11
    %p189 = scmp.lt.s32.totalorder %s11, 3
    %p190 = pnand %p188, %p189
    %p191 = pneg %p190
    // Predicated region
    $region37: #{gcn_forward.2} parent=5 // pred_check
      _
    $region38: #{gcn_forward.2} parent=5 // pred_check_branch
      %193 = sbr.rel (%p190) target = $region40
    $region39: #{gcn_forward.2} parent=5 // pred_region
      %s194 = ssub.s32 %s11, 1
      %s195 = smul.u32 16, %s16
      %p196 = scmp.lt.s32.totalorder %s195, 31
      %s197 = scalar_select %p196, %s195, 31
      %s198 = smul.addr %s197, 2
      %s199 = smul.addr %s198, 8
      %s200 = scalar_lea.vmem %s0, %s199
      %p201 = pneg %p37
      %p202 = pneg %p34
      %p203 = pneg %p58
      %p204 = pneg %p55
      %p205 = pneg %p79
      %p206 = pneg %p76
      %p207 = pneg %p100
      %p208 = pneg %p97
      %p209 = pneg %p121
      %p210 = pneg %p118
      %p211 = pneg %p147
      %p212 = pneg %p144
      %s213 = smul.u32 16, %s16
      %p214 = scmp.lt.s32.totalorder %s213, 31
      %s215 = scalar_select %p214, %s213, 31
      %s216 = smul.addr %s215, 8
      %s217 = scalar_lea.vmem %s5, %s216
      %s218 = smul.u32 16, %s16
      %p219 = scmp.lt.s32.totalorder %s218, 31
      %s220 = scalar_select %p219, %s218, 31
      %s221 = smul.addr %s220, 2
      %s222 = smul.addr %s221, 8
      %s223 = scalar_lea.vmem %s0, %s222
      %s224 = smul.u32 16, %s16
      %s225 = smul.u32 16, %s16
      %p226 = scmp.lt.s32.totalorder %s225, 31
      %s227 = scalar_select %p226, %s225, 31
      %s228 = smul.addr %s227, 8
      %s229 = scalar_lea.vmem %s5, %s228
      %s230 = smul.u32 16, %s16
      %v231 = vld [vmem:[%s223] sm:$0xff]
      %v232 = vld [vmem:[%s223 + $0x8] sm:$0xff]
      %v233 = vld [vmem:[%s223 + $0x10] sm:$0xff]
      %v234 = vld [vmem:[%s223 + $0x18] sm:$0xff]
      %v235 = vld [vmem:[%s223 + $0x20] sm:$0xff]
      %v236 = vld [vmem:[%s223 + $0x28] sm:$0xff]
      %v237 = vld [vmem:[%s223 + $0x30] sm:$0xff]
      %v238 = vld [vmem:[%s223 + $0x38] sm:$0xff]
      %v239 = vld [vmem:[%s223 + $0x40] sm:$0xff]
      %v240 = vld [vmem:[%s223 + $0x48] sm:$0xff]
      %v241 = vld [vmem:[%s223 + $0x50] sm:$0xff]
      %v242 = vld [vmem:[%s223 + $0x58] sm:$0xff]
      %v243 = vld [vmem:[%s223 + $0x60] sm:$0xff]
      %v244 = vld [vmem:[%s223 + $0x68] sm:$0xff]
      %v245 = vld [vmem:[%s223 + $0x70] sm:$0xff]
      %v246 = vld [vmem:[%s223 + $0x78] sm:$0xff]
      %v247 = vld [vmem:[%s223 + $0x80] sm:$0xff]
      %v248 = vld [vmem:[%s223 + $0x88] sm:$0xff]
      %v249 = vld [vmem:[%s223 + $0x90] sm:$0xff]
      %v250 = vld [vmem:[%s223 + $0x98] sm:$0xff]
      %v251 = vld [vmem:[%s223 + $0xa0] sm:$0xff]
      %v252 = vld [vmem:[%s223 + $0xa8] sm:$0xff]
      %v253 = vld [vmem:[%s223 + $0xb0] sm:$0xff]
      %v254 = vld [vmem:[%s223 + $0xb8] sm:$0xff]
      %v255 = vld [vmem:[%s223 + $0xc0] sm:$0xff]
      %v256 = vld [vmem:[%s223 + $0xc8] sm:$0xff]
      %v257 = vld [vmem:[%s223 + $0xd0] sm:$0xff]
      %v258 = vld [vmem:[%s223 + $0xd8] sm:$0xff]
      %v259 = vld [vmem:[%s223 + $0xe0] sm:$0xff]
      %v260 = vld [vmem:[%s223 + $0xe8] sm:$0xff]
      %v261 = vld [vmem:[%s223 + $0xf0] sm:$0xff]
      %v262 = vld [vmem:[%s223 + $0xf8] sm:$0xff]
      %v263 = vld [vmem:[%s1] sm:$0xff]
      %v264 = vld [vmem:[%s1 + $0x8] sm:$0xff]
      %v265 = vld [vmem:[%s1 + $0x10] sm:$0xff]
      %v266 = vld [vmem:[%s1 + $0x18] sm:$0xff]
      %v267 = vld [vmem:[%s1 + $0x20] sm:$0xff]
      %v268 = vld [vmem:[%s1 + $0x28] sm:$0xff]
      %v269 = vld [vmem:[%s1 + $0x30] sm:$0xff]
      %v270 = vld [vmem:[%s1 + $0x38] sm:$0xff]
      %v271 = vld [vmem:[%s1 + $0x40] sm:$0xff]
      %v272 = vld [vmem:[%s1 + $0x48] sm:$0xff]
      %v273 = vld [vmem:[%s1 + $0x50] sm:$0xff]
      %v274 = vld [vmem:[%s1 + $0x58] sm:$0xff]
      %v275 = vld [vmem:[%s1 + $0x60] sm:$0xff]
      %v276 = vld [vmem:[%s1 + $0x68] sm:$0xff]
      %v277 = vld [vmem:[%s1 + $0x70] sm:$0xff]
      %v278 = vld [vmem:[%s1 + $0x78] sm:$0xff]
      %v279 = vld [vmem:[%s1 + $0x80] sm:$0xff]
      %v280 = vld [vmem:[%s1 + $0x88] sm:$0xff]
      %v281 = vld [vmem:[%s1 + $0x90] sm:$0xff]
      %v282 = vld [vmem:[%s1 + $0x98] sm:$0xff]
      %v283 = vld [vmem:[%s1 + $0xa0] sm:$0xff]
      %v284 = vld [vmem:[%s1 + $0xa8] sm:$0xff]
      %v285 = vld [vmem:[%s1 + $0xb0] sm:$0xff]
      %v286 = vld [vmem:[%s1 + $0xb8] sm:$0xff]
      %v287 = vld [vmem:[%s1 + $0xc0] sm:$0xff]
      %v288 = vld [vmem:[%s1 + $0xc8] sm:$0xff]
      %v289 = vld [vmem:[%s1 + $0xd0] sm:$0xff]
      %v290 = vld [vmem:[%s1 + $0xd8] sm:$0xff]
      %v291 = vld [vmem:[%s1 + $0xe0] sm:$0xff]
      %v292 = vld [vmem:[%s1 + $0xe8] sm:$0xff]
      %v293 = vld [vmem:[%s1 + $0xf0] sm:$0xff]
      %v294 = vld [vmem:[%s1 + $0xf8] sm:$0xff]
      %295 = vmatpush.msra.mxu0 %v278
      %296 = vmatpush.msra.mxu0 %v277
      %297 = vmatpush.msra.mxu0 %v276
      %298 = vmatpush.msra.mxu0 %v275
      %299 = vmatpush.msra.mxu0 %v274
      %300 = vmatpush.msra.mxu0 %v273
      %301 = vmatpush.msra.mxu0 %v272
      %302 = vmatpush.msra.mxu0 %v271
      %303 = vmatpush.msra.mxu0 %v270
      %304 = vmatpush.msra.mxu0 %v269
      %305 = vmatpush.msra.mxu0 %v268
      %306 = vmatpush.msra.mxu0 %v267
      %307 = vmatpush.msra.mxu0 %v266
      %308 = vmatpush.msra.mxu0 %v265
      %309 = vmatpush.msra.mxu0 %v264
      %310 = vmatpush.msra.mxu0 %v263
      %311 = vmatmul.f32.gmra.mxu0 %v231
      %v312 = vpop.f32.mrf.mxu0
      %v313 = vadd.f32 0.0, %v312
      %314 = vmatmul.f32.gmra.mxu0 %v233
      %v315 = vpop.f32.mrf.mxu0
      %v316 = vadd.f32 0.0, %v315
      %317 = vmatmul.f32.gmra.mxu0 %v235
      %v318 = vpop.f32.mrf.mxu0
      %v319 = vadd.f32 0.0, %v318
      %320 = vmatmul.f32.gmra.mxu0 %v237
      %v321 = vpop.f32.mrf.mxu0
      %v322 = vadd.f32 0.0, %v321
      %323 = vmatmul.f32.gmra.mxu0 %v239
      %v324 = vpop.f32.mrf.mxu0
      %v325 = vadd.f32 0.0, %v324
      %326 = vmatmul.f32.gmra.mxu0 %v241
      %v327 = vpop.f32.mrf.mxu0
      %v328 = vadd.f32 0.0, %v327
      %329 = vmatmul.f32.gmra.mxu0 %v243
      %v330 = vpop.f32.mrf.mxu0
      %v331 = vadd.f32 0.0, %v330
      %332 = vmatmul.f32.gmra.mxu0 %v245
      %v333 = vpop.f32.mrf.mxu0
      %v334 = vadd.f32 0.0, %v333
      %335 = vmatmul.f32.gmra.mxu0 %v247
      %v336 = vpop.f32.mrf.mxu0
      %v337 = vadd.f32 0.0, %v336
      %338 = vmatmul.f32.gmra.mxu0 %v249
      %v339 = vpop.f32.mrf.mxu0
      %v340 = vadd.f32 0.0, %v339
      %341 = vmatmul.f32.gmra.mxu0 %v251
      %v342 = vpop.f32.mrf.mxu0
      %v343 = vadd.f32 0.0, %v342
      %344 = vmatmul.f32.gmra.mxu0 %v253
      %v345 = vpop.f32.mrf.mxu0
      %v346 = vadd.f32 0.0, %v345
      %347 = vmatmul.f32.gmra.mxu0 %v255
      %v348 = vpop.f32.mrf.mxu0
      %v349 = vadd.f32 0.0, %v348
      %350 = vmatmul.f32.gmra.mxu0 %v257
      %v351 = vpop.f32.mrf.mxu0
      %v352 = vadd.f32 0.0, %v351
      %353 = vmatmul.f32.gmra.mxu0 %v259
      %v354 = vpop.f32.mrf.mxu0
      %v355 = vadd.f32 0.0, %v354
      %356 = vmatmul.f32.gmra.mxu0 %v261
      %v357 = vpop.f32.mrf.mxu0
      %v358 = vadd.f32 0.0, %v357
      %359 = vdwg.mxu0
      %360 = vmatpush.msra.mxu0 %v294
      %361 = vmatpush.msra.mxu0 %v293
      %362 = vmatpush.msra.mxu0 %v292
      %363 = vmatpush.msra.mxu0 %v291
      %364 = vmatpush.msra.mxu0 %v290
      %365 = vmatpush.msra.mxu0 %v289
      %366 = vmatpush.msra.mxu0 %v288
      %367 = vmatpush.msra.mxu0 %v287
      %368 = vmatpush.msra.mxu0 %v286
      %369 = vmatpush.msra.mxu0 %v285
      %370 = vmatpush.msra.mxu0 %v284
      %371 = vmatpush.msra.mxu0 %v283
      %372 = vmatpush.msra.mxu0 %v282
      %373 = vmatpush.msra.mxu0 %v281
      %374 = vmatpush.msra.mxu0 %v280
      %375 = vmatpush.msra.mxu0 %v279
      %376 = vmatmul.f32.gmra.mxu0 %v232
      %v377 = vpop.f32.mrf.mxu0
      %v378 = vadd.f32 %v313, %v377
      %379 = vmatmul.f32.gmra.mxu0 %v234
      %v380 = vpop.f32.mrf.mxu0
      %v381 = vadd.f32 %v316, %v380
      %382 = vmatmul.f32.gmra.mxu0 %v236
      %v383 = vpop.f32.mrf.mxu0
      %v384 = vadd.f32 %v319, %v383
      %385 = vmatmul.f32.gmra.mxu0 %v238
      %v386 = vpop.f32.mrf.mxu0
      %v387 = vadd.f32 %v322, %v386
      %388 = vmatmul.f32.gmra.mxu0 %v240
      %v389 = vpop.f32.mrf.mxu0
      %v390 = vadd.f32 %v325, %v389
      %391 = vmatmul.f32.gmra.mxu0 %v242
      %v392 = vpop.f32.mrf.mxu0
      %v393 = vadd.f32 %v328, %v392
      %394 = vmatmul.f32.gmra.mxu0 %v244
      %v395 = vpop.f32.mrf.mxu0
      %v396 = vadd.f32 %v331, %v395
      %397 = vmatmul.f32.gmra.mxu0 %v246
      %v398 = vpop.f32.mrf.mxu0
      %v399 = vadd.f32 %v334, %v398
      %400 = vmatmul.f32.gmra.mxu0 %v248
      %v401 = vpop.f32.mrf.mxu0
      %v402 = vadd.f32 %v337, %v401
      %403 = vmatmul.f32.gmra.mxu0 %v250
      %v404 = vpop.f32.mrf.mxu0
      %v405 = vadd.f32 %v340, %v404
      %406 = vmatmul.f32.gmra.mxu0 %v252
      %v407 = vpop.f32.mrf.mxu0
      %v408 = vadd.f32 %v343, %v407
      %409 = vmatmul.f32.gmra.mxu0 %v254
      %v410 = vpop.f32.mrf.mxu0
      %v411 = vadd.f32 %v346, %v410
      %412 = vmatmul.f32.gmra.mxu0 %v256
      %v413 = vpop.f32.mrf.mxu0
      %v414 = vadd.f32 %v349, %v413
      %415 = vmatmul.f32.gmra.mxu0 %v258
      %v416 = vpop.f32.mrf.mxu0
      %v417 = vadd.f32 %v352, %v416
      %418 = vmatmul.f32.gmra.mxu0 %v260
      %v419 = vpop.f32.mrf.mxu0
      %v420 = vadd.f32 %v355, %v419
      %421 = vmatmul.f32.gmra.mxu0 %v262
      %v422 = vpop.f32.mrf.mxu0
      %v423 = vadd.f32 %v358, %v422
      %424 = vdwg.mxu0
      %v425 = vld [vmem:[%s2] sm:$0xff]
      %v426 = vld [vmem:[%s2 + $0x8] sm:$0xff]
      %v427 = vld [vmem:[%s2 + $0x10] sm:$0xff]
      %v428 = vld [vmem:[%s2 + $0x18] sm:$0xff]
      %v429 = vld [vmem:[%s2 + $0x20] sm:$0xff]
      %v430 = vld [vmem:[%s2 + $0x28] sm:$0xff]
      %v431 = vld [vmem:[%s2 + $0x30] sm:$0xff]
      %v432 = vld [vmem:[%s2 + $0x38] sm:$0xff]
      %v433 = vld [vmem:[%s2 + $0x40] sm:$0xff]
      %v434 = vld [vmem:[%s2 + $0x48] sm:$0xff]
      %v435 = vld [vmem:[%s2 + $0x50] sm:$0xff]
      %v436 = vld [vmem:[%s2 + $0x58] sm:$0xff]
      %v437 = vld [vmem:[%s2 + $0x60] sm:$0xff]
      %v438 = vld [vmem:[%s2 + $0x68] sm:$0xff]
      %v439 = vld [vmem:[%s2 + $0x70] sm:$0xff]
      %v440 = vld [vmem:[%s2 + $0x78] sm:$0xff]
      %v441 = vld [vmem:[%s3] sm:$0x1]
      %v443 = vperm.slane %v441, 0
      %445 = vmatpush.msra.mxu0 %v440
      %446 = vmatpush.msra.mxu0 %v439
      %447 = vmatpush.msra.mxu0 %v438
      %448 = vmatpush.msra.mxu0 %v437
      %449 = vmatpush.msra.mxu0 %v436
      %450 = vmatpush.msra.mxu0 %v435
      %451 = vmatpush.msra.mxu0 %v434
      %452 = vmatpush.msra.mxu0 %v433
      %453 = vmatpush.msra.mxu0 %v432
      %454 = vmatpush.msra.mxu0 %v431
      %455 = vmatpush.msra.mxu0 %v430
      %456 = vmatpush.msra.mxu0 %v429
      %457 = vmatpush.msra.mxu0 %v428
      %458 = vmatpush.msra.mxu0 %v427
      %459 = vmatpush.msra.mxu0 %v426
      %460 = vmatpush.msra.mxu0 %v425
      %461 = vmatmul.f32.gmra.mxu0 %v378
      %v462 = vpop.f32.mrf.mxu0
      %v463 = vadd.f32 %v443, %v462
      %464 = vmatmul.f32.gmra.mxu0 %v381
      %v465 = vpop.f32.mrf.mxu0
      %v466 = vadd.f32 %v443, %v465
      %467 = vmatmul.f32.gmra.mxu0 %v384
      %v468 = vpop.f32.mrf.mxu0
      %v469 = vadd.f32 %v443, %v468
      %470 = vmatmul.f32.gmra.mxu0 %v387
      %v471 = vpop.f32.mrf.mxu0
      %v472 = vadd.f32 %v443, %v471
      %473 = vmatmul.f32.gmra.mxu0 %v390
      %v474 = vpop.f32.mrf.mxu0
      %v475 = vadd.f32 %v443, %v474
      %476 = vmatmul.f32.gmra.mxu0 %v393
      %v477 = vpop.f32.mrf.mxu0
      %v478 = vadd.f32 %v443, %v477
      %479 = vmatmul.f32.gmra.mxu0 %v396
      %v480 = vpop.f32.mrf.mxu0
      %v481 = vadd.f32 %v443, %v480
      %482 = vmatmul.f32.gmra.mxu0 %v399
      %v483 = vpop.f32.mrf.mxu0
      %v484 = vadd.f32 %v443, %v483
      %485 = vmatmul.f32.gmra.mxu0 %v402
      %v486 = vpop.f32.mrf.mxu0
      %v487 = vadd.f32 %v443, %v486
      %488 = vmatmul.f32.gmra.mxu0 %v405
      %v489 = vpop.f32.mrf.mxu0
      %v490 = vadd.f32 %v443, %v489
      %491 = vmatmul.f32.gmra.mxu0 %v408
      %v492 = vpop.f32.mrf.mxu0
      %v493 = vadd.f32 %v443, %v492
      %494 = vmatmul.f32.gmra.mxu0 %v411
      %v495 = vpop.f32.mrf.mxu0
      %v496 = vadd.f32 %v443, %v495
      %497 = vmatmul.f32.gmra.mxu0 %v414
      %v498 = vpop.f32.mrf.mxu0
      %v499 = vadd.f32 %v443, %v498
      %500 = vmatmul.f32.gmra.mxu0 %v417
      %v501 = vpop.f32.mrf.mxu0
      %v502 = vadd.f32 %v443, %v501
      %503 = vmatmul.f32.gmra.mxu0 %v420
      %v504 = vpop.f32.mrf.mxu0
      %v505 = vadd.f32 %v443, %v504
      %506 = vmatmul.f32.gmra.mxu0 %v423
      %v507 = vpop.f32.mrf.mxu0
      %v508 = vadd.f32 %v443, %v507
      %509 = vdwg.mxu0
      %v510 = vmax.f32 %v463, 0.0
      %v511 = vmax.f32 %v466, 0.0
      %v512 = vmax.f32 %v469, 0.0
      %v513 = vmax.f32 %v472, 0.0
      %v514 = vmax.f32 %v475, 0.0
      %v515 = vmax.f32 %v478, 0.0
      %v516 = vmax.f32 %v481, 0.0
      %v517 = vmax.f32 %v484, 0.0
      %v518 = vmax.f32 %v487, 0.0
      %v519 = vmax.f32 %v490, 0.0
      %v520 = vmax.f32 %v493, 0.0
      %v521 = vmax.f32 %v496, 0.0
      %v522 = vmax.f32 %v499, 0.0
      %v523 = vmax.f32 %v502, 0.0
      %v524 = vmax.f32 %v505, 0.0
      %v525 = vmax.f32 %v508, 0.0
      %v526 = vld [vmem:[%s4] sm:$0xff]
      %v527 = vld [vmem:[%s4 + $0x8] sm:$0xff]
      %v528 = vld [vmem:[%s4 + $0x10] sm:$0xff]
      %v529 = vld [vmem:[%s4 + $0x18] sm:$0xff]
      %v530 = vld [vmem:[%s4 + $0x20] sm:$0xff]
      %v531 = vld [vmem:[%s4 + $0x28] sm:$0xff]
      %v532 = vld [vmem:[%s4 + $0x30] sm:$0xff]
      %v533 = vld [vmem:[%s4 + $0x38] sm:$0xff]
      %v534 = vld [vmem:[%s4 + $0x40] sm:$0xff]
      %v535 = vld [vmem:[%s4 + $0x48] sm:$0xff]
      %v536 = vld [vmem:[%s4 + $0x50] sm:$0xff]
      %v537 = vld [vmem:[%s4 + $0x58] sm:$0xff]
      %v538 = vld [vmem:[%s4 + $0x60] sm:$0xff]
      %v539 = vld [vmem:[%s4 + $0x68] sm:$0xff]
      %v540 = vld [vmem:[%s4 + $0x70] sm:$0xff]
      %v541 = vld [vmem:[%s4 + $0x78] sm:$0xff]
      %542 = vmatpush.msra.mxu0 %v541
      %543 = vmatpush.msra.mxu0 %v540
      %544 = vmatpush.msra.mxu0 %v539
      %545 = vmatpush.msra.mxu0 %v538
      %546 = vmatpush.msra.mxu0 %v537
      %547 = vmatpush.msra.mxu0 %v536
      %548 = vmatpush.msra.mxu0 %v535
      %549 = vmatpush.msra.mxu0 %v534
      %550 = vmatpush.msra.mxu0 %v533
      %551 = vmatpush.msra.mxu0 %v532
      %552 = vmatpush.msra.mxu0 %v531
      %553 = vmatpush.msra.mxu0 %v530
      %554 = vmatpush.msra.mxu0 %v529
      %555 = vmatpush.msra.mxu0 %v528
      %556 = vmatpush.msra.mxu0 %v527
      %557 = vmatpush.msra.mxu0 %v526
      %558 = vmatmul.f32.gmra.mxu0 %v510
      %v559 = vpop.f32.mrf.mxu0
      %v560 = vadd.f32 0.0, %v559
      %561 = vmatmul.f32.gmra.mxu0 %v511
      %v562 = vpop.f32.mrf.mxu0
      %v563 = vadd.f32 0.0, %v562
      %564 = vmatmul.f32.gmra.mxu0 %v512
      %v565 = vpop.f32.mrf.mxu0
      %v566 = vadd.f32 0.0, %v565
      %567 = vmatmul.f32.gmra.mxu0 %v513
      %v568 = vpop.f32.mrf.mxu0
      %v569 = vadd.f32 0.0, %v568
      %570 = vmatmul.f32.gmra.mxu0 %v514
      %v571 = vpop.f32.mrf.mxu0
      %v572 = vadd.f32 0.0, %v571
      %573 = vmatmul.f32.gmra.mxu0 %v515
      %v574 = vpop.f32.mrf.mxu0
      %v575 = vadd.f32 0.0, %v574
      %576 = vmatmul.f32.gmra.mxu0 %v516
      %v577 = vpop.f32.mrf.mxu0
      %v578 = vadd.f32 0.0, %v577
      %579 = vmatmul.f32.gmra.mxu0 %v517
      %v580 = vpop.f32.mrf.mxu0
      %v581 = vadd.f32 0.0, %v580
      %582 = vmatmul.f32.gmra.mxu0 %v518
      %v583 = vpop.f32.mrf.mxu0
      %v584 = vadd.f32 0.0, %v583
      %585 = vmatmul.f32.gmra.mxu0 %v519
      %v586 = vpop.f32.mrf.mxu0
      %v587 = vadd.f32 0.0, %v586
      %588 = vmatmul.f32.gmra.mxu0 %v520
      %v589 = vpop.f32.mrf.mxu0
      %v590 = vadd.f32 0.0, %v589
      %591 = vmatmul.f32.gmra.mxu0 %v521
      %v592 = vpop.f32.mrf.mxu0
      %v593 = vadd.f32 0.0, %v592
      %594 = vmatmul.f32.gmra.mxu0 %v522
      %v595 = vpop.f32.mrf.mxu0
      %v596 = vadd.f32 0.0, %v595
      %597 = vmatmul.f32.gmra.mxu0 %v523
      %v598 = vpop.f32.mrf.mxu0
      %v599 = vadd.f32 0.0, %v598
      %600 = vmatmul.f32.gmra.mxu0 %v524
      %v601 = vpop.f32.mrf.mxu0
      %v602 = vadd.f32 0.0, %v601
      %603 = vmatmul.f32.gmra.mxu0 %v525
      %v604 = vpop.f32.mrf.mxu0
      %v605 = vadd.f32 0.0, %v604
      %606 = vdwg.mxu0
      %607 = vst [vmem:[%s229] sm:$0xff] %v560
      %608 = vst [vmem:[%s229 + $0x8] sm:$0xff] %v563
      %609 = vst [vmem:[%s229 + $0x10] sm:$0xff] %v566
      %610 = vst [vmem:[%s229 + $0x18] sm:$0xff] %v569
      %611 = vst [vmem:[%s229 + $0x20] sm:$0xff] %v572
      %612 = vst [vmem:[%s229 + $0x28] sm:$0xff] %v575
      %613 = vst [vmem:[%s229 + $0x30] sm:$0xff] %v578
      %614 = vst [vmem:[%s229 + $0x38] sm:$0xff] %v581
      %615 = vst [vmem:[%s229 + $0x40] sm:$0xff] %v584
      %616 = vst [vmem:[%s229 + $0x48] sm:$0xff] %v587
      %617 = vst [vmem:[%s229 + $0x50] sm:$0xff] %v590
      %618 = vst [vmem:[%s229 + $0x58] sm:$0xff] %v593
      %619 = vst [vmem:[%s229 + $0x60] sm:$0xff] %v596
      %620 = vst [vmem:[%s229 + $0x68] sm:$0xff] %v599
      %621 = vst [vmem:[%s229 + $0x70] sm:$0xff] %v602
      %622 = vst [vmem:[%s229 + $0x78] sm:$0xff] %v605
      %s623 = smul.u32 16, %s16
      %p624 = scmp.lt.s32.totalorder %s623, 31
      %s625 = scalar_select %p624, %s623, 31
      %s626 = smul.addr %s625, 8
      %s627 = scalar_lea.vmem %s5, %s626
      // Predicated region
      $region41: #{gcn_forward.2} parent=39 // pred_check
        %p628 = pneg %p144
      $region42: #{gcn_forward.2} parent=39 // pred_check_branch
        %630 = sbr.rel (%p628) target = $region44
      $region43: #{gcn_forward.2} parent=39 // pred_region
        %s631 = smul.u32 16, %s16
      $region44: #{gcn_forward.2} parent=39 // pred_fallthru
        _
    $region40: #{gcn_forward.2} parent=5 // pred_fallthru
      _
    %p632 = scmp.le.s32.totalorder 2, %s11
    // Predicated region
    $region45: #{gcn_forward.2} parent=5 // pred_check
      %p633 = pneg %p632
    $region46: #{gcn_forward.2} parent=5 // pred_check_branch
      %635 = sbr.rel (%p633) target = $region48
    $region47: #{gcn_forward.2} parent=5 // pred_region
      %s636 = ssub.s32 %s11, 2
      // Predicated region
      $region49: #{gcn_forward.2} parent=47 // pred_check
        %p637 = pneg %p150
      $region50: #{gcn_forward.2} parent=47 // pred_check_branch
        %639 = sbr.rel (%p637) target = $region52
      $region51: #{gcn_forward.2} parent=47 // pred_region
        %s640 = smul.u32 16, %s17
        %p641 = scmp.lt.s32.totalorder %s640, 31
        %s642 = scalar_select %p641, %s640, 31
        %s643 = smul.addr %s642, 8
        %s644 = scalar_lea.vmem %s5, %s643
      $region52: #{gcn_forward.2} parent=47 // pred_fallthru
        _
    $region48: #{gcn_forward.2} parent=5 // pred_fallthru
      _
  $region6: #{gcn_forward.2} parent=0 // loop_footer
    %s15 = sadd.s32 1, %s11
  $region7: #{gcn_forward.2} parent=0 // loop_footer_branch
    %10 = sbr.rel target = $region3
  $region8: #{gcn_forward.2} parent=0 // loop_exit
    _

</llo_original>
